<compile_context>
chip_gen: v5e
topology: v5e:2x2
jax: 0.10.0
libtpu: 0.0.40
codegen_flags: <defaults>
</compile_context>

<pallas_src>
import functools

import jax
import jax.numpy as jnp
from jax.experimental import pallas as pl
from jax.experimental.pallas import tpu as pltpu


def _round_up(x, m):
    return (x + m - 1) // m * m


def _fused_conv_stack_kernel(x_ref, w_ref, b_ref, o_ref, buf_a, buf_b, *,
                             num_layers, K, L, Cin, pad):
    # x_ref : (L, Cin)               one batch element, original channel width
    # w_ref : (num_layers, K, C, C)  bf16 weights, zero-padded to common width C
    # b_ref : (num_layers, 1, C)     f32 biases, zero-padded
    # o_ref : (L, C)                 lane-dense output (sliced to output_dim outside)
    # buf_a, buf_b : VMEM (L + K - 1, C) f32 ping-pong activation buffers.

    # Zero both buffers once; the halo rows ([0:pad] and [pad+L:]) are never
    # written afterwards, so they stay zero for every layer -> this IS the
    # conv's zero padding (no host-side jnp.pad, no per-layer HBM copy).
    buf_a[...] = jnp.zeros_like(buf_a)
    buf_b[...] = jnp.zeros_like(buf_b)
    # Place the input in the interior rows / first Cin lanes (rest stays zero,
    # matching the zero-padded weight rows so padded channels contribute 0).
    buf_a[pad:pad + L, 0:Cin] = x_ref[...]

    src, dst = buf_a, buf_b
    for l in range(num_layers):                      # static unroll over layers
        acc = jnp.zeros(o_ref.shape, jnp.float32)    # (L, C) f32 accumulator
        for k in range(K):                           # static unroll over taps
            acc += jnp.dot(src[k:k + L, :].astype(jnp.bfloat16),  # bf16 -> MXU
                           w_ref[l, k],
                           preferred_element_type=jnp.float32)
        acc += b_ref[l]                              # (1, C) broadcast bias
        if l < num_layers - 1:
            acc = jnp.maximum(acc, 0.0)              # fused ReLU (VPU filler)
            dst[pad:pad + L, :] = acc                # activation stays in VMEM
            src, dst = dst, src
        else:
            o_ref[...] = acc.astype(o_ref.dtype)     # lane-dense final store


def conv_stack(x, w_packed, b_packed, *, num_layers, kernel_size):
    """Run the fused Conv1d stack in one pallas_call. Returns (B, L, C_pad)."""
    B, L, Cin = x.shape
    _, K, C, _ = w_packed.shape
    pad = K // 2

    kernel = functools.partial(
        _fused_conv_stack_kernel,
        num_layers=num_layers, K=K, L=L, Cin=Cin, pad=pad)

    return pl.pallas_call(
        kernel,
        out_shape=jax.ShapeDtypeStruct((B, L, C), jnp.float32),
        grid_spec=pltpu.PrefetchScalarGridSpec(
            num_scalar_prefetch=0,
            grid=(B,),
            in_specs=[
                # per-batch input slab; batch dim squeezed out of the kernel ref
                pl.BlockSpec((None, L, Cin), lambda b: (b, 0, 0)),
                # whole weight / bias slabs; constant index_map -> stay resident
                pl.BlockSpec((num_layers, K, C, C), lambda b: (0, 0, 0, 0)),
                pl.BlockSpec((num_layers, 1, C), lambda b: (0, 0, 0)),
            ],
            out_specs=pl.BlockSpec((None, L, C), lambda b: (b, 0, 0)),
            scratch_shapes=[
                pltpu.VMEM((L + K - 1, C), jnp.float32),   # ping
                pltpu.VMEM((L + K - 1, C), jnp.float32),   # pong
            ],
        ),
        compiler_params=pltpu.CompilerParams(
            dimension_semantics=("parallel",),
            # Explicit VMEM budget with headroom (tiny at demo shapes);
            # re-derive for production UniVTG sizes, esp. on v7x (64 MiB VMEM).
            vmem_limit_bytes=32 * 1024 * 1024,
        ),
    )(x, w_packed, b_packed)


class ConvPallas:
    """Equivalent of the PyTorch `Conv` module (Conv1d stack with ReLU)."""

    def __init__(self, input_dim, hidden_dim, output_dim, num_layers,
                 kernel_size, key):
        # Odd kernel_size keeps L_out == L (same as PyTorch with padding=K//2).
        assert kernel_size % 2 == 1, "odd kernel_size expected (padding=K//2)"
        self.num_layers = num_layers
        self.kernel_size = kernel_size
        self.output_dim = output_dim

        h = [hidden_dim] * (num_layers - 1)
        dims_in = [input_dim] + h
        dims_out = h + [output_dim]

        # Common lane-dense channel width for the fused kernel.
        self.c_pad = _round_up(max(dims_in + dims_out), 128)

        self.params_f32 = []   # original-precision params (for the reference)
        w_packed = jnp.zeros(
            (num_layers, kernel_size, self.c_pad, self.c_pad), jnp.float32)
        b_packed = jnp.zeros((num_layers, 1, self.c_pad), jnp.float32)
        for l, (c_in, c_out) in enumerate(zip(dims_in, dims_out)):
            key, wk, bk = jax.random.split(key, 3)
            fan_in = c_in * kernel_size
            bound = 1.0 / (fan_in ** 0.5)
            # PyTorch Conv1d weight is (Cout, Cin, K); stored here as (K, Cin, Cout).
            w = jax.random.uniform(wk, (kernel_size, c_in, c_out),
                                   jnp.float32, -bound, bound)
            b = jax.random.uniform(bk, (c_out,), jnp.float32, -bound, bound)
            self.params_f32.append((w, b))
            w_packed = w_packed.at[l, :, :c_in, :c_out].set(w)
            b_packed = b_packed.at[l, 0, :c_out].set(b)

        # bf16 weights feed the MXU directly and halve weight DMA/VMEM; the
        # zero rows/cols keep padded channels exactly zero through the stack.
        self.w_packed = w_packed.astype(jnp.bfloat16)
        self.b_packed = b_packed  # bias add + accumulation stay f32

    def __call__(self, x):
        # x: (B, L, input_dim) -> (B, L, output_dim), matching
        # permute(0,2,1) -> conv stack -> permute(0,2,1) in the PyTorch module.
        out_padded = conv_stack(x, self.w_packed, self.b_packed,
                                num_layers=self.num_layers,
                                kernel_size=self.kernel_size)
        return out_padded[..., :self.output_dim]


if __name__ == "__main__":
    key = jax.random.PRNGKey(0)
    key, xk, pk = jax.random.split(key, 3)

    B, L = 2, 16
    input_dim, hidden_dim, output_dim = 32, 32, 8
    num_layers, kernel_size = 3, 3

    model = ConvPallas(input_dim, hidden_dim, output_dim, num_layers,
                       kernel_size, pk)
    x = jax.random.normal(xk, (B, L, input_dim), jnp.float32)

    out = model(x)
    jax.block_until_ready(out)

    # Pure-JAX f32 reference (same math as the PyTorch module).
    ref = x
    pad = kernel_size // 2
    for i, (w, b) in enumerate(model.params_f32):
        ref = jax.lax.conv_general_dilated(
            ref, w, window_strides=(1,), padding=[(pad, pad)],
            dimension_numbers=("NWC", "WIO", "NWC")) + b
        if i < num_layers - 1:
            ref = jnp.maximum(ref, 0.0)

    assert out.shape == (B, L, output_dim)
    # Kernel feeds the MXU bf16 operands (f32 accumulate) -> relaxed tolerance
    # against the pure-f32 reference.
    max_err = float(jnp.max(jnp.abs(out - ref)))
    assert jnp.allclose(out, ref, atol=2.5e-2, rtol=2.5e-2), max_err
    print("KERNEL_OK")
</pallas_src>

<mosaic_0001>
module attributes {stable_mosaic.version = 11 : i64} {
  func.func @_fused_conv_stack_kernel(%arg0: i32, %arg1: memref<1x16x32xf32, #tpu.memory_space<vmem>>, %arg2: memref<3x3x128x128xbf16, #tpu.memory_space<vmem>>, %arg3: memref<3x1x128xf32, #tpu.memory_space<vmem>>, %arg4: memref<1x16x128xf32, #tpu.memory_space<vmem>>, %arg5: memref<18x128xf32, #tpu.memory_space<vmem>>, %arg6: memref<18x128xf32, #tpu.memory_space<vmem>>) attributes {dimension_semantics = [#tpu.dimension_semantics<parallel>], iteration_bounds = array<i64: 2>, scalar_prefetch = 0 : i64, scratch_operands = 2 : i64, tpu.core_type = #tpu.core_type<tc>, window_params = [{transform_indices = @transform_0, window_bounds = array<i64: 1, 16, 32>}, {pipeline_mode = #tpu.pipeline_mode<synchronous>, transform_indices = @transform_1, window_bounds = array<i64: 3, 3, 128, 128>}, {pipeline_mode = #tpu.pipeline_mode<synchronous>, transform_indices = @transform_2, window_bounds = array<i64: 3, 1, 128>}, {transform_indices = @transform_3, window_bounds = array<i64: 1, 16, 128>}]} {
    %cst = arith.constant 0.000000e+00 : f32
    %0 = vector.broadcast %cst : f32 to vector<18x128xf32>
    %c0 = arith.constant 0 : index
    %c0_0 = arith.constant 0 : index
    %1 = vector.load %arg5[%c0, %c0_0] : memref<18x128xf32, #tpu.memory_space<vmem>>, vector<18x128xf32>
    tpu.vector_store %arg5[%c0, %c0_0], %0 {strides = array<i32>} : memref<18x128xf32, #tpu.memory_space<vmem>>, vector<18x128xf32>,
    %cst_1 = arith.constant 0.000000e+00 : f32
    %2 = vector.broadcast %cst_1 : f32 to vector<18x128xf32>
    %c0_2 = arith.constant 0 : index
    %c0_3 = arith.constant 0 : index
    %3 = vector.load %arg6[%c0_2, %c0_3] : memref<18x128xf32, #tpu.memory_space<vmem>>, vector<18x128xf32>
    tpu.vector_store %arg6[%c0_2, %c0_3], %2 {strides = array<i32>} : memref<18x128xf32, #tpu.memory_space<vmem>>, vector<18x128xf32>,
    %c0_4 = arith.constant 0 : index
    %c0_5 = arith.constant 0 : index
    %c0_6 = arith.constant 0 : index
    %4 = vector.load %arg1[%c0_4, %c0_5, %c0_6] : memref<1x16x32xf32, #tpu.memory_space<vmem>>, vector<1x16x32xf32>
    %5 = vector.shape_cast %4 : vector<1x16x32xf32> to vector<16x32xf32>
    %c1 = arith.constant 1 : index
    %c0_7 = arith.constant 0 : index
    %6 = vector.load %arg5[%c1, %c0_7] : memref<18x128xf32, #tpu.memory_space<vmem>>, vector<16x32xf32>
    tpu.vector_store %arg5[%c1, %c0_7], %5 {strides = array<i32>} : memref<18x128xf32, #tpu.memory_space<vmem>>, vector<16x32xf32>,
    %cst_8 = arith.constant 0.000000e+00 : f32
    %7 = vector.broadcast %cst_8 : f32 to vector<16x128xf32>
    %c0_9 = arith.constant 0 : index
    %c0_10 = arith.constant 0 : index
    %8 = vector.load %arg5[%c0_9, %c0_10] : memref<18x128xf32, #tpu.memory_space<vmem>>, vector<16x128xf32>
    %9 = arith.truncf %8 : vector<16x128xf32> to vector<16x128xbf16>
    %c0_11 = arith.constant 0 : index
    %c0_12 = arith.constant 0 : index
    %c0_13 = arith.constant 0 : index
    %c0_14 = arith.constant 0 : index
    %10 = vector.load %arg2[%c0_11, %c0_12, %c0_13, %c0_14] : memref<3x3x128x128xbf16, #tpu.memory_space<vmem>>, vector<1x1x128x128xbf16>
    %11 = vector.shape_cast %10 : vector<1x1x128x128xbf16> to vector<128x128xbf16>
    %cst_15 = arith.constant dense<0.000000e+00> : vector<16x128xf32>
    %12 = tpu.matmul %9, %11, %cst_15 {dimension_numbers = #tpu.dot_dimension_numbers<[1], [0], [0], [1], [0, 0, 1, 1], [], []>} : vector<16x128xbf16>, vector<128x128xbf16>, vector<16x128xf32> -> vector<16x128xf32>
    %13 = arith.addf %7, %12 : vector<16x128xf32>
    %c1_16 = arith.constant 1 : index
    %c0_17 = arith.constant 0 : index
    %14 = vector.load %arg5[%c1_16, %c0_17] : memref<18x128xf32, #tpu.memory_space<vmem>>, vector<16x128xf32>
    %15 = arith.truncf %14 : vector<16x128xf32> to vector<16x128xbf16>
    %c0_18 = arith.constant 0 : index
    %c1_19 = arith.constant 1 : index
    %c0_20 = arith.constant 0 : index
    %c0_21 = arith.constant 0 : index
    %16 = vector.load %arg2[%c0_18, %c1_19, %c0_20, %c0_21] : memref<3x3x128x128xbf16, #tpu.memory_space<vmem>>, vector<1x1x128x128xbf16>
    %17 = vector.shape_cast %16 : vector<1x1x128x128xbf16> to vector<128x128xbf16>
    %cst_22 = arith.constant dense<0.000000e+00> : vector<16x128xf32>
    %18 = tpu.matmul %15, %17, %cst_22 {dimension_numbers = #tpu.dot_dimension_numbers<[1], [0], [0], [1], [0, 0, 1, 1], [], []>} : vector<16x128xbf16>, vector<128x128xbf16>, vector<16x128xf32> -> vector<16x128xf32>
    %19 = arith.addf %13, %18 : vector<16x128xf32>
    %c2 = arith.constant 2 : index
    %c0_23 = arith.constant 0 : index
    %20 = vector.load %arg5[%c2, %c0_23] : memref<18x128xf32, #tpu.memory_space<vmem>>, vector<16x128xf32>
    %21 = arith.truncf %20 : vector<16x128xf32> to vector<16x128xbf16>
    %c0_24 = arith.constant 0 : index
    %c2_25 = arith.constant 2 : index
    %c0_26 = arith.constant 0 : index
    %c0_27 = arith.constant 0 : index
    %22 = vector.load %arg2[%c0_24, %c2_25, %c0_26, %c0_27] : memref<3x3x128x128xbf16, #tpu.memory_space<vmem>>, vector<1x1x128x128xbf16>
    %23 = vector.shape_cast %22 : vector<1x1x128x128xbf16> to vector<128x128xbf16>
    %cst_28 = arith.constant dense<0.000000e+00> : vector<16x128xf32>
    %24 = tpu.matmul %21, %23, %cst_28 {dimension_numbers = #tpu.dot_dimension_numbers<[1], [0], [0], [1], [0, 0, 1, 1], [], []>} : vector<16x128xbf16>, vector<128x128xbf16>, vector<16x128xf32> -> vector<16x128xf32>
    %25 = arith.addf %19, %24 : vector<16x128xf32>
    %c0_29 = arith.constant 0 : index
    %c0_30 = arith.constant 0 : index
    %c0_31 = arith.constant 0 : index
    %26 = vector.load %arg3[%c0_29, %c0_30, %c0_31] : memref<3x1x128xf32, #tpu.memory_space<vmem>>, vector<1x1x128xf32>
    %27 = vector.shape_cast %26 : vector<1x1x128xf32> to vector<1x128xf32>
    %28 = vector.broadcast %27 : vector<1x128xf32> to vector<16x128xf32>
    %29 = arith.addf %25, %28 : vector<16x128xf32>
    %cst_32 = arith.constant 0.000000e+00 : f32
    %30 = vector.broadcast %cst_32 : f32 to vector<16x128xf32>
    %31 = arith.maximumf %29, %30 : vector<16x128xf32>
    %c1_33 = arith.constant 1 : index
    %c0_34 = arith.constant 0 : index
    %32 = vector.load %arg6[%c1_33, %c0_34] : memref<18x128xf32, #tpu.memory_space<vmem>>, vector<16x128xf32>
    tpu.vector_store %arg6[%c1_33, %c0_34], %31 {strides = array<i32>} : memref<18x128xf32, #tpu.memory_space<vmem>>, vector<16x128xf32>,
    %cst_35 = arith.constant 0.000000e+00 : f32
    %33 = vector.broadcast %cst_35 : f32 to vector<16x128xf32>
    %c0_36 = arith.constant 0 : index
    %c0_37 = arith.constant 0 : index
    %34 = vector.load %arg6[%c0_36, %c0_37] : memref<18x128xf32, #tpu.memory_space<vmem>>, vector<16x128xf32>
    %35 = arith.truncf %34 : vector<16x128xf32> to vector<16x128xbf16>
    %c1_38 = arith.constant 1 : index
    %c0_39 = arith.constant 0 : index
    %c0_40 = arith.constant 0 : index
    %c0_41 = arith.constant 0 : index
    %36 = vector.load %arg2[%c1_38, %c0_39, %c0_40, %c0_41] : memref<3x3x128x128xbf16, #tpu.memory_space<vmem>>, vector<1x1x128x128xbf16>
    %37 = vector.shape_cast %36 : vector<1x1x128x128xbf16> to vector<128x128xbf16>
    %cst_42 = arith.constant dense<0.000000e+00> : vector<16x128xf32>
    %38 = tpu.matmul %35, %37, %cst_42 {dimension_numbers = #tpu.dot_dimension_numbers<[1], [0], [0], [1], [0, 0, 1, 1], [], []>} : vector<16x128xbf16>, vector<128x128xbf16>, vector<16x128xf32> -> vector<16x128xf32>
    %39 = arith.addf %33, %38 : vector<16x128xf32>
    %c1_43 = arith.constant 1 : index
    %c0_44 = arith.constant 0 : index
    %40 = vector.load %arg6[%c1_43, %c0_44] : memref<18x128xf32, #tpu.memory_space<vmem>>, vector<16x128xf32>
    %41 = arith.truncf %40 : vector<16x128xf32> to vector<16x128xbf16>
    %c1_45 = arith.constant 1 : index
    %c1_46 = arith.constant 1 : index
    %c0_47 = arith.constant 0 : index
    %c0_48 = arith.constant 0 : index
    %42 = vector.load %arg2[%c1_45, %c1_46, %c0_47, %c0_48] : memref<3x3x128x128xbf16, #tpu.memory_space<vmem>>, vector<1x1x128x128xbf16>
    %43 = vector.shape_cast %42 : vector<1x1x128x128xbf16> to vector<128x128xbf16>
    %cst_49 = arith.constant dense<0.000000e+00> : vector<16x128xf32>
    %44 = tpu.matmul %41, %43, %cst_49 {dimension_numbers = #tpu.dot_dimension_numbers<[1], [0], [0], [1], [0, 0, 1, 1], [], []>} : vector<16x128xbf16>, vector<128x128xbf16>, vector<16x128xf32> -> vector<16x128xf32>
    %45 = arith.addf %39, %44 : vector<16x128xf32>
    %c2_50 = arith.constant 2 : index
    %c0_51 = arith.constant 0 : index
    %46 = vector.load %arg6[%c2_50, %c0_51] : memref<18x128xf32, #tpu.memory_space<vmem>>, vector<16x128xf32>
    %47 = arith.truncf %46 : vector<16x128xf32> to vector<16x128xbf16>
    %c1_52 = arith.constant 1 : index
    %c2_53 = arith.constant 2 : index
    %c0_54 = arith.constant 0 : index
    %c0_55 = arith.constant 0 : index
    %48 = vector.load %arg2[%c1_52, %c2_53, %c0_54, %c0_55] : memref<3x3x128x128xbf16, #tpu.memory_space<vmem>>, vector<1x1x128x128xbf16>
    %49 = vector.shape_cast %48 : vector<1x1x128x128xbf16> to vector<128x128xbf16>
    %cst_56 = arith.constant dense<0.000000e+00> : vector<16x128xf32>
    %50 = tpu.matmul %47, %49, %cst_56 {dimension_numbers = #tpu.dot_dimension_numbers<[1], [0], [0], [1], [0, 0, 1, 1], [], []>} : vector<16x128xbf16>, vector<128x128xbf16>, vector<16x128xf32> -> vector<16x128xf32>
    %51 = arith.addf %45, %50 : vector<16x128xf32>
    %c1_57 = arith.constant 1 : index
    %c0_58 = arith.constant 0 : index
    %c0_59 = arith.constant 0 : index
    %52 = vector.load %arg3[%c1_57, %c0_58, %c0_59] : memref<3x1x128xf32, #tpu.memory_space<vmem>>, vector<1x1x128xf32>
    %53 = vector.shape_cast %52 : vector<1x1x128xf32> to vector<1x128xf32>
    %54 = vector.broadcast %53 : vector<1x128xf32> to vector<16x128xf32>
    %55 = arith.addf %51, %54 : vector<16x128xf32>
    %cst_60 = arith.constant 0.000000e+00 : f32
    %56 = vector.broadcast %cst_60 : f32 to vector<16x128xf32>
    %57 = arith.maximumf %55, %56 : vector<16x128xf32>
    %c1_61 = arith.constant 1 : index
    %c0_62 = arith.constant 0 : index
    %58 = vector.load %arg5[%c1_61, %c0_62] : memref<18x128xf32, #tpu.memory_space<vmem>>, vector<16x128xf32>
    tpu.vector_store %arg5[%c1_61, %c0_62], %57 {strides = array<i32>} : memref<18x128xf32, #tpu.memory_space<vmem>>, vector<16x128xf32>,
    %cst_63 = arith.constant 0.000000e+00 : f32
    %59 = vector.broadcast %cst_63 : f32 to vector<16x128xf32>
    %c0_64 = arith.constant 0 : index
    %c0_65 = arith.constant 0 : index
    %60 = vector.load %arg5[%c0_64, %c0_65] : memref<18x128xf32, #tpu.memory_space<vmem>>, vector<16x128xf32>
    %61 = arith.truncf %60 : vector<16x128xf32> to vector<16x128xbf16>
    %c2_66 = arith.constant 2 : index
    %c0_67 = arith.constant 0 : index
    %c0_68 = arith.constant 0 : index
    %c0_69 = arith.constant 0 : index
    %62 = vector.load %arg2[%c2_66, %c0_67, %c0_68, %c0_69] : memref<3x3x128x128xbf16, #tpu.memory_space<vmem>>, vector<1x1x128x128xbf16>
    %63 = vector.shape_cast %62 : vector<1x1x128x128xbf16> to vector<128x128xbf16>
    %cst_70 = arith.constant dense<0.000000e+00> : vector<16x128xf32>
    %64 = tpu.matmul %61, %63, %cst_70 {dimension_numbers = #tpu.dot_dimension_numbers<[1], [0], [0], [1], [0, 0, 1, 1], [], []>} : vector<16x128xbf16>, vector<128x128xbf16>, vector<16x128xf32> -> vector<16x128xf32>
    %65 = arith.addf %59, %64 : vector<16x128xf32>
    %c1_71 = arith.constant 1 : index
    %c0_72 = arith.constant 0 : index
    %66 = vector.load %arg5[%c1_71, %c0_72] : memref<18x128xf32, #tpu.memory_space<vmem>>, vector<16x128xf32>
    %67 = arith.truncf %66 : vector<16x128xf32> to vector<16x128xbf16>
    %c2_73 = arith.constant 2 : index
    %c1_74 = arith.constant 1 : index
    %c0_75 = arith.constant 0 : index
    %c0_76 = arith.constant 0 : index
    %68 = vector.load %arg2[%c2_73, %c1_74, %c0_75, %c0_76] : memref<3x3x128x128xbf16, #tpu.memory_space<vmem>>, vector<1x1x128x128xbf16>
    %69 = vector.shape_cast %68 : vector<1x1x128x128xbf16> to vector<128x128xbf16>
    %cst_77 = arith.constant dense<0.000000e+00> : vector<16x128xf32>
    %70 = tpu.matmul %67, %69, %cst_77 {dimension_numbers = #tpu.dot_dimension_numbers<[1], [0], [0], [1], [0, 0, 1, 1], [], []>} : vector<16x128xbf16>, vector<128x128xbf16>, vector<16x128xf32> -> vector<16x128xf32>
    %71 = arith.addf %65, %70 : vector<16x128xf32>
    %c2_78 = arith.constant 2 : index
    %c0_79 = arith.constant 0 : index
    %72 = vector.load %arg5[%c2_78, %c0_79] : memref<18x128xf32, #tpu.memory_space<vmem>>, vector<16x128xf32>
    %73 = arith.truncf %72 : vector<16x128xf32> to vector<16x128xbf16>
    %c2_80 = arith.constant 2 : index
    %c2_81 = arith.constant 2 : index
    %c0_82 = arith.constant 0 : index
    %c0_83 = arith.constant 0 : index
    %74 = vector.load %arg2[%c2_80, %c2_81, %c0_82, %c0_83] : memref<3x3x128x128xbf16, #tpu.memory_space<vmem>>, vector<1x1x128x128xbf16>
    %75 = vector.shape_cast %74 : vector<1x1x128x128xbf16> to vector<128x128xbf16>
    %cst_84 = arith.constant dense<0.000000e+00> : vector<16x128xf32>
    %76 = tpu.matmul %73, %75, %cst_84 {dimension_numbers = #tpu.dot_dimension_numbers<[1], [0], [0], [1], [0, 0, 1, 1], [], []>} : vector<16x128xbf16>, vector<128x128xbf16>, vector<16x128xf32> -> vector<16x128xf32>
    %77 = arith.addf %71, %76 : vector<16x128xf32>
    %c2_85 = arith.constant 2 : index
    %c0_86 = arith.constant 0 : index
    %c0_87 = arith.constant 0 : index
    %78 = vector.load %arg3[%c2_85, %c0_86, %c0_87] : memref<3x1x128xf32, #tpu.memory_space<vmem>>, vector<1x1x128xf32>
    %79 = vector.shape_cast %78 : vector<1x1x128xf32> to vector<1x128xf32>
    %80 = vector.broadcast %79 : vector<1x128xf32> to vector<16x128xf32>
    %81 = arith.addf %77, %80 : vector<16x128xf32>
    %c0_88 = arith.constant 0 : index
    %c0_89 = arith.constant 0 : index
    %c0_90 = arith.constant 0 : index
    %82 = vector.load %arg4[%c0_88, %c0_89, %c0_90] : memref<1x16x128xf32, #tpu.memory_space<vmem>>, vector<1x16x128xf32>
    %83 = vector.shape_cast %82 : vector<1x16x128xf32> to vector<16x128xf32>
    %84 = vector.shape_cast %81 : vector<16x128xf32> to vector<1x16x128xf32>
    tpu.vector_store %arg4[%c0_88, %c0_89, %c0_90], %84 {strides = array<i32>} : memref<1x16x128xf32, #tpu.memory_space<vmem>>, vector<1x16x128xf32>,
    return
  }
  func.func @transform_0(%arg0: i32) -> (i32, i32, i32) {
    %c0_i32 = arith.constant 0 : i32
    %c0_i32_0 = arith.constant 0 : i32
    %c0_i32_1 = arith.constant 0 : i32
    return %arg0, %c0_i32, %c0_i32_0 : i32, i32, i32
  }
  func.func @transform_1(%arg0: i32) -> (i32, i32, i32, i32) {
    %c0_i32 = arith.constant 0 : i32
    %c0_i32_0 = arith.constant 0 : i32
    %c0_i32_1 = arith.constant 0 : i32
    %c0_i32_2 = arith.constant 0 : i32
    %c0_i32_3 = arith.constant 0 : i32
    return %c0_i32, %c0_i32_0, %c0_i32_1, %c0_i32_2 : i32, i32, i32, i32
  }
  func.func @transform_2(%arg0: i32) -> (i32, i32, i32) {
    %c0_i32 = arith.constant 0 : i32
    %c0_i32_0 = arith.constant 0 : i32
    %c0_i32_1 = arith.constant 0 : i32
    %c0_i32_2 = arith.constant 0 : i32
    return %c0_i32, %c0_i32_0, %c0_i32_1 : i32, i32, i32
  }
  func.func @transform_3(%arg0: i32) -> (i32, i32, i32) {
    %c0_i32 = arith.constant 0 : i32
    %c0_i32_0 = arith.constant 0 : i32
    %c0_i32_1 = arith.constant 0 : i32
    return %arg0, %c0_i32, %c0_i32_0 : i32, i32, i32
  }
}

</mosaic_0001>

<llo_original>
// kernel: tpu_custom_call.1
$region0: #{tpu_custom_call.1}
  #allocation0 [shape = 'u32[]', space=smem, size = 0x4, offset = 0x4, fixed_abs, tag = 'smem constant byte address 0x4 - core index']
  #allocation1 [shape = 'u32[72,128]{1,0:T(1,128)}', space=vmem, size = 0x9000, scoped, tag = 'internal scratch']
  #allocation2 [shape = 'f32[18,128]{1,0:T(8,128)}', space=vmem, size = 0x3000, scoped, tag = 'scratch operand']
  #allocation3 [shape = 'f32[18,128]{1,0:T(8,128)}', space=vmem, size = 0x3000, scoped, tag = 'scratch operand']
  %s0 = inlined_call_operand.hbm [shape: f32[2,16,32], index: 0, kind: input, shape index: {}]
  %s1 = inlined_call_operand.hbm [shape: bf16[3,3,128,128], index: 1, kind: input, shape index: {}]
  %s2 = inlined_call_operand.hbm [shape: f32[3,1,128], index: 2, kind: input, shape index: {}]
  %s3 = inlined_call_operand.hbm [shape: f32[2,16,128], index: 3, kind: output, shape index: {}]
  %s4 = sld [smem:[#allocation0]]
  $region57: #{tpu_custom_call.1} parent=0
    _
  %s6 = ssub.s32 1, %s4
  %s7 = scalar_select 0, %s6, %s4
  $region1: #{tpu_custom_call.1} parent=0
    #allocation4 [shape = 'u8[16384]{0}', space=vmem, size = 0x4000, scoped, tag = 'input window, operand 0']
    #allocation5 [shape = 's32[2]{0}', space=sflag, size = 0x8, scoped, tag = 'scoped memory for tpu_custom_call.1']
    #allocation6 [shape = 's32[2]{0}', space=sflag, size = 0x8, scoped, tag = 'scoped memory for tpu_custom_call.1']
    #allocation7 [shape = 'u8[294912]{0}', space=vmem, size = 0x48000, scoped, tag = 'input window, operand 1, single buffered']
    #allocation8 [shape = 's32[1]{0}', space=sflag, size = 0x4, scoped, tag = 'scoped memory for tpu_custom_call.1']
    #allocation9 [shape = 'u8[1536]{0}', space=vmem, size = 0x800, scoped, tag = 'input window, operand 2, single buffered']
    #allocation10 [shape = 'u8[16384]{0}', space=vmem, size = 0x4000, scoped, tag = 'output window, operand 0']
    %8 = vsyncpa [#allocation5], 0
    %s9 = scalar_lea.sflag [#allocation5], 1
    %10 = vsyncpa %s9, 0
    %11 = vsyncpa [#allocation8], 0
    %12 = vsyncpa [#allocation6], 0
    %s13 = scalar_lea.sflag [#allocation6], 1
    %14 = vsyncpa %s13, 0
    loop: start=0, step=1, limit=4
    $region2: #{tpu_custom_call.1} parent=1 // loop_pre_header
      _
    $region3: #{tpu_custom_call.1} parent=1 // loop_header
      %s16 = sphi 0, %s20
      %p17 = scmp.ge.s32.totalorder %s16, 4
      %s26 = sphi 0, %s28
      %s29 = sphi 0, %s26
      %s30 = sphi 0, %s29
      %s46 = sphi 0, %s30
      %s50 = sphi 0, %s50
      %s52 = sphi 0, %s50
      %s53 = sphi 0, %s52
      %s67 = sphi 0, %s53
      %s71 = sphi 0, %s71
      %s73 = sphi 0, %s71
      %s74 = sphi 0, %s73
      %s88 = sphi 0, %s74
      %s94 = sphi 0, %s96
      %s97 = sphi 0, %s94
      %s98 = sphi 0, %s97
      %s114 = sphi 0, %s98
    $region4: #{tpu_custom_call.1} parent=1 // loop_header_branch
      %19 = sbr.rel (%p17) target = $region8
    $region5: #{tpu_custom_call.1} parent=1 // loop_body
      %s21 = ssub.s32 %s16, 1
      %s22 = ssub.s32 %s16, 2
      %s23 = sadd.s32 %s16, 1
      %s24 = ssub.s32 %s16, %s23
      %p25 = scmp.eq.s32.totalorder %s24, 0
      %s27 = sadd.s32 %s26, 1
      %s28 = scalar_select %p25, %s26, %s27
      %p31 = pneg %p25
      %p32 = scmp.eq.s32.totalorder %s16, 1
      %p33 = por %p31, %p32
      %p34 = scmp.ne.s32.totalorder %s26, %s29
      %p35 = scmp.eq.s32.totalorder %s16, 0
      %p36 = por %p34, %p35
      %p37 = scmp.ne.s32.totalorder %s26, %s29
      %p38 = scmp.eq.s32.totalorder %s21, 1
      %p39 = por %p37, %p38
      %p40 = scmp.ne.s32.totalorder %s29, %s30
      %p41 = scmp.eq.s32.totalorder %s21, 0
      %p42 = por %p40, %p41
      %p43 = scmp.ne.s32.totalorder %s29, %s30
      %p44 = scmp.eq.s32.totalorder %s22, 1
      %p45 = por %p43, %p44
      %p47 = scmp.ne.s32.totalorder %s30, %s46
      %p48 = scmp.eq.s32.totalorder %s22, 0
      %p49 = por %p47, %p48
      %s51 = sadd.s32 %s50, 1
      %p54 = scmp.eq.s32.totalorder %s16, 1
      %p55 = scmp.ne.s32.totalorder %s50, %s52
      %p56 = scmp.eq.s32.totalorder %s16, 0
      %p57 = por %p55, %p56
      %p58 = scmp.ne.s32.totalorder %s50, %s52
      %p59 = scmp.eq.s32.totalorder %s21, 1
      %p60 = por %p58, %p59
      %p61 = scmp.ne.s32.totalorder %s52, %s53
      %p62 = scmp.eq.s32.totalorder %s21, 0
      %p63 = por %p61, %p62
      %p64 = scmp.ne.s32.totalorder %s52, %s53
      %p65 = scmp.eq.s32.totalorder %s22, 1
      %p66 = por %p64, %p65
      %p68 = scmp.ne.s32.totalorder %s53, %s67
      %p69 = scmp.eq.s32.totalorder %s22, 0
      %p70 = por %p68, %p69
      %s72 = sadd.s32 %s71, 1
      %p75 = scmp.eq.s32.totalorder %s16, 1
      %p76 = scmp.ne.s32.totalorder %s71, %s73
      %p77 = scmp.eq.s32.totalorder %s16, 0
      %p78 = por %p76, %p77
      %p79 = scmp.ne.s32.totalorder %s71, %s73
      %p80 = scmp.eq.s32.totalorder %s21, 1
      %p81 = por %p79, %p80
      %p82 = scmp.ne.s32.totalorder %s73, %s74
      %p83 = scmp.eq.s32.totalorder %s21, 0
      %p84 = por %p82, %p83
      %p85 = scmp.ne.s32.totalorder %s73, %s74
      %p86 = scmp.eq.s32.totalorder %s22, 1
      %p87 = por %p85, %p86
      %p89 = scmp.ne.s32.totalorder %s74, %s88
      %p90 = scmp.eq.s32.totalorder %s22, 0
      %p91 = por %p89, %p90
      %s92 = ssub.s32 %s16, %s23
      %p93 = scmp.eq.s32.totalorder %s92, 0
      %s95 = sadd.s32 %s94, 1
      %s96 = scalar_select %p93, %s94, %s95
      %p99 = pneg %p93
      %p100 = scmp.eq.s32.totalorder %s16, 1
      %p101 = por %p99, %p100
      %p102 = scmp.ne.s32.totalorder %s94, %s97
      %p103 = scmp.eq.s32.totalorder %s16, 0
      %p104 = por %p102, %p103
      %p105 = scmp.ne.s32.totalorder %s94, %s97
      %p106 = scmp.eq.s32.totalorder %s21, 1
      %p107 = por %p105, %p106
      %p108 = scmp.ne.s32.totalorder %s97, %s98
      %p109 = scmp.eq.s32.totalorder %s21, 0
      %p110 = por %p108, %p109
      %p111 = scmp.ne.s32.totalorder %s97, %s98
      %p112 = scmp.eq.s32.totalorder %s22, 1
      %p113 = por %p111, %p112
      %p115 = scmp.ne.s32.totalorder %s98, %s114
      %p116 = scmp.eq.s32.totalorder %s22, 0
      %p117 = por %p115, %p116
      %p118 = scmp.le.s32.totalorder 1, %s16
      %p119 = scmp.lt.s32.totalorder %s16, 3
      %p120 = pnand %p118, %p119
      %p121 = pneg %p120
      // Predicated region
      $region9: #{tpu_custom_call.1} parent=5 // pred_check
        _
      $region10: #{tpu_custom_call.1} parent=5 // pred_check_branch
        %123 = sbr.rel (%p120) target = $region12
      $region11: #{tpu_custom_call.1} parent=5 // pred_region
        %s124 = ssub.s32 %s16, 1
        // Predicated region
        $region13: #{tpu_custom_call.1} parent=11 // pred_check
          %p125 = pneg %p63
        $region14: #{tpu_custom_call.1} parent=11 // pred_check_branch
          %127 = sbr.rel (%p125) target = $region16
        $region15: #{tpu_custom_call.1} parent=11 // pred_region
          %129 = vsyncadd [#allocation8], 0
          %s130 = sshll.u32 %s1, 4
          %s131 = int_to_ptr.hbm [resolvable:$true] %s130
          %s132 = sshll.u32 [#allocation7], 4
          %s133 = int_to_ptr.vmem [resolvable:$true] %s132
          %138 = dma.hbm_to_vmem [thread:$0]  %s131, 9216, %s133, [#allocation8], 64, 64, 4
        $region16: #{tpu_custom_call.1} parent=11 // pred_fallthru
          _
        // Predicated region
        $region17: #{tpu_custom_call.1} parent=11 // pred_check
          %p139 = pneg %p84
        $region18: #{tpu_custom_call.1} parent=11 // pred_check_branch
          %141 = sbr.rel (%p139) target = $region20
        $region19: #{tpu_custom_call.1} parent=11 // pred_region
          %143 = vsyncadd [#allocation8], 0
          %s144 = sshll.u32 %s2, 4
          %s145 = int_to_ptr.hbm [resolvable:$true] %s144
          %s146 = sshll.u32 [#allocation9], 4
          %s147 = int_to_ptr.vmem [resolvable:$true] %s146
          %152 = dma.hbm_to_vmem [thread:$0]  %s145, 48, %s147, [#allocation8], 16, 16, 1
        $region20: #{tpu_custom_call.1} parent=11 // pred_fallthru
          _
      $region12: #{tpu_custom_call.1} parent=5 // pred_fallthru
        _
      %p153 = scmp.lt.s32.totalorder %s16, 2
      // Predicated region
      $region21: #{tpu_custom_call.1} parent=5 // pred_check
        %p154 = pneg %p153
      $region22: #{tpu_custom_call.1} parent=5 // pred_check_branch
        %156 = sbr.rel (%p154) target = $region24
      $region23: #{tpu_custom_call.1} parent=5 // pred_region
        // Predicated region
        $region25: #{tpu_custom_call.1} parent=23 // pred_check
          %p157 = pneg %p36
        $region26: #{tpu_custom_call.1} parent=23 // pred_check_branch
          %159 = sbr.rel (%p157) target = $region28
        $region27: #{tpu_custom_call.1} parent=23 // pred_region
          %s160 = sand.u32 %s26, 1
          %s161 = scalar_lea.sflag [#allocation5], %s160
          %s162 = sand.u32 %s26, 1
          %s163 = smul.addr %s162, 16
          %s164 = scalar_lea.vmem [#allocation4], %s163
          %166 = vsyncadd %s161, 0
          %s167 = smul.addr %s16, 2
          %s168 = smul.addr %s167, 8
          %s169 = scalar_lea.hbm %s0, %s168
          %s170 = sshll.u32 %s169, 4
          %s171 = int_to_ptr.hbm [resolvable:$true] %s170
          %s172 = sshll.u32 %s164, 4
          %s173 = int_to_ptr.vmem [resolvable:$true] %s172
          %178 = dma.hbm_to_vmem [thread:$0]  %s171, 256, %s173, %s161, 128, 128, 8
        $region28: #{tpu_custom_call.1} parent=23 // pred_fallthru
          _
      $region24: #{tpu_custom_call.1} parent=5 // pred_fallthru
        _
      %p179 = scmp.le.s32.totalorder 1, %s16
      %p180 = scmp.lt.s32.totalorder %s16, 3
      %p181 = pnand %p179, %p180
      %p182 = pneg %p181
      // Predicated region
      $region29: #{tpu_custom_call.1} parent=5 // pred_check
        _
      $region30: #{tpu_custom_call.1} parent=5 // pred_check_branch
        %184 = sbr.rel (%p181) target = $region32
      $region31: #{tpu_custom_call.1} parent=5 // pred_region
        %s185 = ssub.s32 %s16, 1
        %s186 = sand.u32 %s29, 1
        %s187 = scalar_lea.sflag [#allocation5], %s186
        %s188 = sand.u32 %s29, 1
        %s189 = smul.addr %s188, 16
        %s190 = scalar_lea.vmem [#allocation4], %s189
        // Predicated region
        $region33: #{tpu_custom_call.1} parent=31 // pred_check
          %p191 = pneg %p42
        $region34: #{tpu_custom_call.1} parent=31 // pred_check_branch
          %193 = sbr.rel (%p191) target = $region36
        $region35: #{tpu_custom_call.1} parent=31 // pred_region
          %195 = dma.done %s187, 256
        $region36: #{tpu_custom_call.1} parent=31 // pred_fallthru
          _
        // Predicated region
        $region37: #{tpu_custom_call.1} parent=31 // pred_check
          %p196 = pneg %p63
        $region38: #{tpu_custom_call.1} parent=31 // pred_check_branch
          %198 = sbr.rel (%p196) target = $region40
        $region39: #{tpu_custom_call.1} parent=31 // pred_region
          %200 = dma.done [#allocation8], 9216
        $region40: #{tpu_custom_call.1} parent=31 // pred_fallthru
          _
        // Predicated region
        $region41: #{tpu_custom_call.1} parent=31 // pred_check
          %p201 = pneg %p84
        $region42: #{tpu_custom_call.1} parent=31 // pred_check_branch
          %203 = sbr.rel (%p201) target = $region44
        $region43: #{tpu_custom_call.1} parent=31 // pred_region
          %205 = dma.done [#allocation8], 48
        $region44: #{tpu_custom_call.1} parent=31 // pred_fallthru
          _
        %s206 = sand.u32 %s29, 1
        %s207 = scalar_lea.sflag [#allocation5], %s206
        %s208 = sand.u32 %s29, 1
        %s209 = smul.addr %s208, 16
        %s210 = scalar_lea.vmem [#allocation4], %s209
        %p211 = pneg %p42
        %p212 = pneg %p39
        %p213 = pneg %p63
        %p214 = pneg %p60
        %p215 = pneg %p84
        %p216 = pneg %p81
        %p217 = pneg %p110
        %p218 = pneg %p107
        %s219 = sand.u32 %s97, 1
        %s220 = scalar_lea.sflag [#allocation6], %s219
        %s221 = sand.u32 %s97, 1
        %s222 = smul.addr %s221, 16
        %s223 = scalar_lea.vmem [#allocation10], %s222
        %224 = vst [vmem:[#allocation2] sm:$0xff] 0.0
        %225 = vst [vmem:[#allocation2 + $0x8] sm:$0xff] 0.0
        %226 = vst [vmem:[#allocation2 + $0x10] sm:$0x3] 0.0
        %227 = vst [vmem:[#allocation3] sm:$0xff] 0.0
        %228 = vst [vmem:[#allocation3 + $0x8] sm:$0xff] 0.0
        %229 = vst [vmem:[#allocation3 + $0x10] sm:$0x3] 0.0
        %v230 = vld [vmem:[%s190] sm:$0xff]
        %v231 = vld [vmem:[%s190 + $0x8] sm:$0xff]
        %vm232 = vcmask 261120
        %233 = vst.msk [vmem:[#allocation2 + $0x1] sm:$0xff] %vm232, %v230
        %234 = vst.msk [vmem:[#allocation2 + $0x9] sm:$0xff] %vm232, %v231
        %v235 = vld [vmem:[#allocation2] sm:$0xff]
        %v236 = vld [vmem:[#allocation2 + $0x8] sm:$0xff]
        %v237 = vpack.c.bf16 %v236, %v235
        %v238 = vld [vmem:[#allocation7] sm:$0xf]
        %v239 = vld [vmem:[#allocation7 + $0x4] sm:$0xf]
        %v240 = vld [vmem:[#allocation7 + $0x8] sm:$0xf]
        %v241 = vld [vmem:[#allocation7 + $0xc] sm:$0xf]
        %v242 = vld [vmem:[#allocation7 + $0x10] sm:$0xf]
        %v243 = vld [vmem:[#allocation7 + $0x14] sm:$0xf]
        %v244 = vld [vmem:[#allocation7 + $0x18] sm:$0xf]
        %v245 = vld [vmem:[#allocation7 + $0x1c] sm:$0xf]
        %v246 = vld [vmem:[#allocation7 + $0x20] sm:$0xf]
        %v247 = vld [vmem:[#allocation7 + $0x24] sm:$0xf]
        %v248 = vld [vmem:[#allocation7 + $0x28] sm:$0xf]
        %v249 = vld [vmem:[#allocation7 + $0x2c] sm:$0xf]
        %v250 = vld [vmem:[#allocation7 + $0x30] sm:$0xf]
        %v251 = vld [vmem:[#allocation7 + $0x34] sm:$0xf]
        %v252 = vld [vmem:[#allocation7 + $0x38] sm:$0xf]
        %v253 = vld [vmem:[#allocation7 + $0x3c] sm:$0xf]
        %v254 = vld [vmem:[#allocation2 + $0x1] sm:$0xff]
        %v255 = vld [vmem:[#allocation2 + $0x9] sm:$0xff]
        %v256 = vpack.c.bf16 %v255, %v254
        %s257 = scalar_lea.vmem [#allocation7], 64
        %v258 = vld [vmem:[%s257] sm:$0xf]
        %v259 = vld [vmem:[%s257 + $0x4] sm:$0xf]
        %v260 = vld [vmem:[%s257 + $0x8] sm:$0xf]
        %v261 = vld [vmem:[%s257 + $0xc] sm:$0xf]
        %v262 = vld [vmem:[%s257 + $0x10] sm:$0xf]
        %v263 = vld [vmem:[%s257 + $0x14] sm:$0xf]
        %v264 = vld [vmem:[%s257 + $0x18] sm:$0xf]
        %v265 = vld [vmem:[%s257 + $0x1c] sm:$0xf]
        %v266 = vld [vmem:[%s257 + $0x20] sm:$0xf]
        %v267 = vld [vmem:[%s257 + $0x24] sm:$0xf]
        %v268 = vld [vmem:[%s257 + $0x28] sm:$0xf]
        %v269 = vld [vmem:[%s257 + $0x2c] sm:$0xf]
        %v270 = vld [vmem:[%s257 + $0x30] sm:$0xf]
        %v271 = vld [vmem:[%s257 + $0x34] sm:$0xf]
        %v272 = vld [vmem:[%s257 + $0x38] sm:$0xf]
        %v273 = vld [vmem:[%s257 + $0x3c] sm:$0xf]
        %v290 = vunpack.c.l.b16 %v258
        %v291 = vunpack.c.l.b16 %v259
        %v292 = vunpack.c.l.b16 %v260
        %v293 = vunpack.c.l.b16 %v261
        %v294 = vunpack.c.l.b16 %v262
        %v295 = vunpack.c.l.b16 %v263
        %v296 = vunpack.c.l.b16 %v264
        %v297 = vunpack.c.l.b16 %v265
        %v298 = vunpack.c.l.b16 %v266
        %v299 = vunpack.c.l.b16 %v267
        %v300 = vunpack.c.l.b16 %v268
        %v301 = vunpack.c.l.b16 %v269
        %v302 = vunpack.c.l.b16 %v270
        %v303 = vunpack.c.l.b16 %v271
        %v304 = vunpack.c.l.b16 %v272
        %v305 = vunpack.c.l.b16 %v273
        %v306 = vpack.c.b16 %v291, %v290
        %v307 = vpack.c.b16 %v293, %v292
        %v308 = vpack.c.b16 %v295, %v294
        %v309 = vpack.c.b16 %v297, %v296
        %v310 = vpack.c.b16 %v299, %v298
        %v311 = vpack.c.b16 %v301, %v300
        %v312 = vpack.c.b16 %v303, %v302
        %v313 = vpack.c.b16 %v305, %v304
        %322 = vmatpush.bf16.msra.mxu0 %v313
        %323 = vmatpush.bf16.msra.mxu0 %v312
        %324 = vmatpush.bf16.msra.mxu0 %v311
        %325 = vmatpush.bf16.msra.mxu0 %v310
        %326 = vmatpush.bf16.msra.mxu0 %v309
        %327 = vmatpush.bf16.msra.mxu0 %v308
        %328 = vmatpush.bf16.msra.mxu0 %v307
        %329 = vmatpush.bf16.msra.mxu0 %v306
        %330 = vmatmul.bf16.gmra.mxu0 %v256
        %v331 = vpop.f32.mrf.mxu0
        %v332 = vadd.f32 0.0, %v331
        %v333 = vpop.f32.mrf.mxu0
        %v334 = vadd.f32 0.0, %v333
        %335 = vdwg.mxu0
        %v352 = vunpack.c.l.b16 %v238
        %v353 = vunpack.c.l.b16 %v239
        %v354 = vunpack.c.l.b16 %v240
        %v355 = vunpack.c.l.b16 %v241
        %v356 = vunpack.c.l.b16 %v242
        %v357 = vunpack.c.l.b16 %v243
        %v358 = vunpack.c.l.b16 %v244
        %v359 = vunpack.c.l.b16 %v245
        %v360 = vunpack.c.l.b16 %v246
        %v361 = vunpack.c.l.b16 %v247
        %v362 = vunpack.c.l.b16 %v248
        %v363 = vunpack.c.l.b16 %v249
        %v364 = vunpack.c.l.b16 %v250
        %v365 = vunpack.c.l.b16 %v251
        %v366 = vunpack.c.l.b16 %v252
        %v367 = vunpack.c.l.b16 %v253
        %v368 = vpack.c.b16 %v353, %v352
        %v369 = vpack.c.b16 %v355, %v354
        %v370 = vpack.c.b16 %v357, %v356
        %v371 = vpack.c.b16 %v359, %v358
        %v372 = vpack.c.b16 %v361, %v360
        %v373 = vpack.c.b16 %v363, %v362
        %v374 = vpack.c.b16 %v365, %v364
        %v375 = vpack.c.b16 %v367, %v366
        %384 = vmatpush.bf16.msra.mxu0 %v375
        %385 = vmatpush.bf16.msra.mxu0 %v374
        %386 = vmatpush.bf16.msra.mxu0 %v373
        %387 = vmatpush.bf16.msra.mxu0 %v372
        %388 = vmatpush.bf16.msra.mxu0 %v371
        %389 = vmatpush.bf16.msra.mxu0 %v370
        %390 = vmatpush.bf16.msra.mxu0 %v369
        %391 = vmatpush.bf16.msra.mxu0 %v368
        %392 = vmatmul.bf16.gmra.mxu0 %v237
        %v393 = vpop.f32.mrf.mxu0
        %v394 = vadd.f32 %v332, %v393
        %v395 = vpop.f32.mrf.mxu0
        %v396 = vadd.f32 %v334, %v395
        %397 = vdwg.mxu0
        %v398 = vld [vmem:[#allocation2 + $0x2] sm:$0xff]
        %v399 = vld [vmem:[#allocation2 + $0xa] sm:$0xff]
        %v400 = vpack.c.bf16 %v399, %v398
        %s401 = scalar_lea.vmem [#allocation7], 128
        %v402 = vld [vmem:[%s401] sm:$0xf]
        %v403 = vld [vmem:[%s401 + $0x4] sm:$0xf]
        %v404 = vld [vmem:[%s401 + $0x8] sm:$0xf]
        %v405 = vld [vmem:[%s401 + $0xc] sm:$0xf]
        %v406 = vld [vmem:[%s401 + $0x10] sm:$0xf]
        %v407 = vld [vmem:[%s401 + $0x14] sm:$0xf]
        %v408 = vld [vmem:[%s401 + $0x18] sm:$0xf]
        %v409 = vld [vmem:[%s401 + $0x1c] sm:$0xf]
        %v410 = vld [vmem:[%s401 + $0x20] sm:$0xf]
        %v411 = vld [vmem:[%s401 + $0x24] sm:$0xf]
        %v412 = vld [vmem:[%s401 + $0x28] sm:$0xf]
        %v413 = vld [vmem:[%s401 + $0x2c] sm:$0xf]
        %v414 = vld [vmem:[%s401 + $0x30] sm:$0xf]
        %v415 = vld [vmem:[%s401 + $0x34] sm:$0xf]
        %v416 = vld [vmem:[%s401 + $0x38] sm:$0xf]
        %v417 = vld [vmem:[%s401 + $0x3c] sm:$0xf]
        %v434 = vunpack.c.l.b16 %v402
        %v435 = vunpack.c.l.b16 %v403
        %v436 = vunpack.c.l.b16 %v404
        %v437 = vunpack.c.l.b16 %v405
        %v438 = vunpack.c.l.b16 %v406
        %v439 = vunpack.c.l.b16 %v407
        %v440 = vunpack.c.l.b16 %v408
        %v441 = vunpack.c.l.b16 %v409
        %v442 = vunpack.c.l.b16 %v410
        %v443 = vunpack.c.l.b16 %v411
        %v444 = vunpack.c.l.b16 %v412
        %v445 = vunpack.c.l.b16 %v413
        %v446 = vunpack.c.l.b16 %v414
        %v447 = vunpack.c.l.b16 %v415
        %v448 = vunpack.c.l.b16 %v416
        %v449 = vunpack.c.l.b16 %v417
        %v450 = vpack.c.b16 %v435, %v434
        %v451 = vpack.c.b16 %v437, %v436
        %v452 = vpack.c.b16 %v439, %v438
        %v453 = vpack.c.b16 %v441, %v440
        %v454 = vpack.c.b16 %v443, %v442
        %v455 = vpack.c.b16 %v445, %v444
        %v456 = vpack.c.b16 %v447, %v446
        %v457 = vpack.c.b16 %v449, %v448
        %466 = vmatpush.bf16.msra.mxu0 %v457
        %467 = vmatpush.bf16.msra.mxu0 %v456
        %468 = vmatpush.bf16.msra.mxu0 %v455
        %469 = vmatpush.bf16.msra.mxu0 %v454
        %470 = vmatpush.bf16.msra.mxu0 %v453
        %471 = vmatpush.bf16.msra.mxu0 %v452
        %472 = vmatpush.bf16.msra.mxu0 %v451
        %473 = vmatpush.bf16.msra.mxu0 %v450
        %474 = vmatmul.bf16.gmra.mxu0 %v400
        %v475 = vpop.f32.mrf.mxu0
        %v476 = vadd.f32 0.0, %v475
        %v477 = vpop.f32.mrf.mxu0
        %v478 = vadd.f32 0.0, %v477
        %479 = vdwg.mxu0
        %v480 = vadd.f32 %v394, %v476
        %v481 = vadd.f32 %v396, %v478
        %v482 = vld [vmem:[#allocation9] sm:$0x1]
        %v484 = vperm.slane %v482, 0
        %v486 = vadd.f32 %v480, %v484
        %v487 = vadd.f32 %v481, %v484
        %v488 = vmax.f32 %v486, 0.0
        %v489 = vmax.f32 %v487, 0.0
        %490 = vst [vmem:[#allocation3 + $0x1] sm:$0xff] %v488
        %491 = vst [vmem:[#allocation3 + $0x9] sm:$0xff] %v489
        %v492 = vld [vmem:[#allocation3] sm:$0xff]
        %v493 = vld [vmem:[#allocation3 + $0x8] sm:$0xff]
        %v494 = vpack.c.bf16 %v493, %v492
        %s495 = scalar_lea.vmem [#allocation7], 192
        %v496 = vld [vmem:[%s495] sm:$0xf]
        %v497 = vld [vmem:[%s495 + $0x4] sm:$0xf]
        %v498 = vld [vmem:[%s495 + $0x8] sm:$0xf]
        %v499 = vld [vmem:[%s495 + $0xc] sm:$0xf]
        %v500 = vld [vmem:[%s495 + $0x10] sm:$0xf]
        %v501 = vld [vmem:[%s495 + $0x14] sm:$0xf]
        %v502 = vld [vmem:[%s495 + $0x18] sm:$0xf]
        %v503 = vld [vmem:[%s495 + $0x1c] sm:$0xf]
        %v504 = vld [vmem:[%s495 + $0x20] sm:$0xf]
        %v505 = vld [vmem:[%s495 + $0x24] sm:$0xf]
        %v506 = vld [vmem:[%s495 + $0x28] sm:$0xf]
        %v507 = vld [vmem:[%s495 + $0x2c] sm:$0xf]
        %v508 = vld [vmem:[%s495 + $0x30] sm:$0xf]
        %v509 = vld [vmem:[%s495 + $0x34] sm:$0xf]
        %v510 = vld [vmem:[%s495 + $0x38] sm:$0xf]
        %v511 = vld [vmem:[%s495 + $0x3c] sm:$0xf]
        %v512 = vld [vmem:[#allocation3 + $0x1] sm:$0xff]
        %v513 = vld [vmem:[#allocation3 + $0x9] sm:$0xff]
        %v514 = vpack.c.bf16 %v513, %v512
        %s515 = scalar_lea.vmem [#allocation7], 256
        %v516 = vld [vmem:[%s515] sm:$0xf]
        %v517 = vld [vmem:[%s515 + $0x4] sm:$0xf]
        %v518 = vld [vmem:[%s515 + $0x8] sm:$0xf]
        %v519 = vld [vmem:[%s515 + $0xc] sm:$0xf]
        %v520 = vld [vmem:[%s515 + $0x10] sm:$0xf]
        %v521 = vld [vmem:[%s515 + $0x14] sm:$0xf]
        %v522 = vld [vmem:[%s515 + $0x18] sm:$0xf]
        %v523 = vld [vmem:[%s515 + $0x1c] sm:$0xf]
        %v524 = vld [vmem:[%s515 + $0x20] sm:$0xf]
        %v525 = vld [vmem:[%s515 + $0x24] sm:$0xf]
        %v526 = vld [vmem:[%s515 + $0x28] sm:$0xf]
        %v527 = vld [vmem:[%s515 + $0x2c] sm:$0xf]
        %v528 = vld [vmem:[%s515 + $0x30] sm:$0xf]
        %v529 = vld [vmem:[%s515 + $0x34] sm:$0xf]
        %v530 = vld [vmem:[%s515 + $0x38] sm:$0xf]
        %v531 = vld [vmem:[%s515 + $0x3c] sm:$0xf]
        %v548 = vunpack.c.l.b16 %v516
        %v549 = vunpack.c.l.b16 %v517
        %v550 = vunpack.c.l.b16 %v518
        %v551 = vunpack.c.l.b16 %v519
        %v552 = vunpack.c.l.b16 %v520
        %v553 = vunpack.c.l.b16 %v521
        %v554 = vunpack.c.l.b16 %v522
        %v555 = vunpack.c.l.b16 %v523
        %v556 = vunpack.c.l.b16 %v524
        %v557 = vunpack.c.l.b16 %v525
        %v558 = vunpack.c.l.b16 %v526
        %v559 = vunpack.c.l.b16 %v527
        %v560 = vunpack.c.l.b16 %v528
        %v561 = vunpack.c.l.b16 %v529
        %v562 = vunpack.c.l.b16 %v530
        %v563 = vunpack.c.l.b16 %v531
        %v564 = vpack.c.b16 %v549, %v548
        %v565 = vpack.c.b16 %v551, %v550
        %v566 = vpack.c.b16 %v553, %v552
        %v567 = vpack.c.b16 %v555, %v554
        %v568 = vpack.c.b16 %v557, %v556
        %v569 = vpack.c.b16 %v559, %v558
        %v570 = vpack.c.b16 %v561, %v560
        %v571 = vpack.c.b16 %v563, %v562
        %580 = vmatpush.bf16.msra.mxu0 %v571
        %581 = vmatpush.bf16.msra.mxu0 %v570
        %582 = vmatpush.bf16.msra.mxu0 %v569
        %583 = vmatpush.bf16.msra.mxu0 %v568
        %584 = vmatpush.bf16.msra.mxu0 %v567
        %585 = vmatpush.bf16.msra.mxu0 %v566
        %586 = vmatpush.bf16.msra.mxu0 %v565
        %587 = vmatpush.bf16.msra.mxu0 %v564
        %588 = vmatmul.bf16.gmra.mxu0 %v514
        %v589 = vpop.f32.mrf.mxu0
        %v590 = vadd.f32 0.0, %v589
        %v591 = vpop.f32.mrf.mxu0
        %v592 = vadd.f32 0.0, %v591
        %593 = vdwg.mxu0
        %v610 = vunpack.c.l.b16 %v496
        %v611 = vunpack.c.l.b16 %v497
        %v612 = vunpack.c.l.b16 %v498
        %v613 = vunpack.c.l.b16 %v499
        %v614 = vunpack.c.l.b16 %v500
        %v615 = vunpack.c.l.b16 %v501
        %v616 = vunpack.c.l.b16 %v502
        %v617 = vunpack.c.l.b16 %v503
        %v618 = vunpack.c.l.b16 %v504
        %v619 = vunpack.c.l.b16 %v505
        %v620 = vunpack.c.l.b16 %v506
        %v621 = vunpack.c.l.b16 %v507
        %v622 = vunpack.c.l.b16 %v508
        %v623 = vunpack.c.l.b16 %v509
        %v624 = vunpack.c.l.b16 %v510
        %v625 = vunpack.c.l.b16 %v511
        %v626 = vpack.c.b16 %v611, %v610
        %v627 = vpack.c.b16 %v613, %v612
        %v628 = vpack.c.b16 %v615, %v614
        %v629 = vpack.c.b16 %v617, %v616
        %v630 = vpack.c.b16 %v619, %v618
        %v631 = vpack.c.b16 %v621, %v620
        %v632 = vpack.c.b16 %v623, %v622
        %v633 = vpack.c.b16 %v625, %v624
        %642 = vmatpush.bf16.msra.mxu0 %v633
        %643 = vmatpush.bf16.msra.mxu0 %v632
        %644 = vmatpush.bf16.msra.mxu0 %v631
        %645 = vmatpush.bf16.msra.mxu0 %v630
        %646 = vmatpush.bf16.msra.mxu0 %v629
        %647 = vmatpush.bf16.msra.mxu0 %v628
        %648 = vmatpush.bf16.msra.mxu0 %v627
        %649 = vmatpush.bf16.msra.mxu0 %v626
        %650 = vmatmul.bf16.gmra.mxu0 %v494
        %v651 = vpop.f32.mrf.mxu0
        %v652 = vadd.f32 %v590, %v651
        %v653 = vpop.f32.mrf.mxu0
        %v654 = vadd.f32 %v592, %v653
        %655 = vdwg.mxu0
        %v656 = vld [vmem:[#allocation3 + $0x2] sm:$0xff]
        %v657 = vld [vmem:[#allocation3 + $0xa] sm:$0xff]
        %v658 = vpack.c.bf16 %v657, %v656
        %s659 = scalar_lea.vmem [#allocation7], 320
        %v660 = vld [vmem:[%s659] sm:$0xf]
        %v661 = vld [vmem:[%s659 + $0x4] sm:$0xf]
        %v662 = vld [vmem:[%s659 + $0x8] sm:$0xf]
        %v663 = vld [vmem:[%s659 + $0xc] sm:$0xf]
        %v664 = vld [vmem:[%s659 + $0x10] sm:$0xf]
        %v665 = vld [vmem:[%s659 + $0x14] sm:$0xf]
        %v666 = vld [vmem:[%s659 + $0x18] sm:$0xf]
        %v667 = vld [vmem:[%s659 + $0x1c] sm:$0xf]
        %v668 = vld [vmem:[%s659 + $0x20] sm:$0xf]
        %v669 = vld [vmem:[%s659 + $0x24] sm:$0xf]
        %v670 = vld [vmem:[%s659 + $0x28] sm:$0xf]
        %v671 = vld [vmem:[%s659 + $0x2c] sm:$0xf]
        %v672 = vld [vmem:[%s659 + $0x30] sm:$0xf]
        %v673 = vld [vmem:[%s659 + $0x34] sm:$0xf]
        %v674 = vld [vmem:[%s659 + $0x38] sm:$0xf]
        %v675 = vld [vmem:[%s659 + $0x3c] sm:$0xf]
        %v692 = vunpack.c.l.b16 %v660
        %v693 = vunpack.c.l.b16 %v661
        %v694 = vunpack.c.l.b16 %v662
        %v695 = vunpack.c.l.b16 %v663
        %v696 = vunpack.c.l.b16 %v664
        %v697 = vunpack.c.l.b16 %v665
        %v698 = vunpack.c.l.b16 %v666
        %v699 = vunpack.c.l.b16 %v667
        %v700 = vunpack.c.l.b16 %v668
        %v701 = vunpack.c.l.b16 %v669
        %v702 = vunpack.c.l.b16 %v670
        %v703 = vunpack.c.l.b16 %v671
        %v704 = vunpack.c.l.b16 %v672
        %v705 = vunpack.c.l.b16 %v673
        %v706 = vunpack.c.l.b16 %v674
        %v707 = vunpack.c.l.b16 %v675
        %v708 = vpack.c.b16 %v693, %v692
        %v709 = vpack.c.b16 %v695, %v694
        %v710 = vpack.c.b16 %v697, %v696
        %v711 = vpack.c.b16 %v699, %v698
        %v712 = vpack.c.b16 %v701, %v700
        %v713 = vpack.c.b16 %v703, %v702
        %v714 = vpack.c.b16 %v705, %v704
        %v715 = vpack.c.b16 %v707, %v706
        %724 = vmatpush.bf16.msra.mxu0 %v715
        %725 = vmatpush.bf16.msra.mxu0 %v714
        %726 = vmatpush.bf16.msra.mxu0 %v713
        %727 = vmatpush.bf16.msra.mxu0 %v712
        %728 = vmatpush.bf16.msra.mxu0 %v711
        %729 = vmatpush.bf16.msra.mxu0 %v710
        %730 = vmatpush.bf16.msra.mxu0 %v709
        %731 = vmatpush.bf16.msra.mxu0 %v708
        %732 = vmatmul.bf16.gmra.mxu0 %v658
        %v733 = vpop.f32.mrf.mxu0
        %v734 = vadd.f32 0.0, %v733
        %v735 = vpop.f32.mrf.mxu0
        %v736 = vadd.f32 0.0, %v735
        %737 = vdwg.mxu0
        %v738 = vadd.f32 %v652, %v734
        %v739 = vadd.f32 %v654, %v736
        %s740 = scalar_lea.vmem [#allocation9], 1
        %v741 = vld [vmem:[%s740] sm:$0x1]
        %v743 = vperm.slane %v741, 0
        %v745 = vadd.f32 %v738, %v743
        %v746 = vadd.f32 %v739, %v743
        %v747 = vmax.f32 %v745, 0.0
        %v748 = vmax.f32 %v746, 0.0
        %749 = vst [vmem:[#allocation2 + $0x1] sm:$0xff] %v747
        %750 = vst [vmem:[#allocation2 + $0x9] sm:$0xff] %v748
        %v751 = vld [vmem:[#allocation2] sm:$0xff]
        %v752 = vld [vmem:[#allocation2 + $0x8] sm:$0xff]
        %v753 = vpack.c.bf16 %v752, %v751
        %s754 = scalar_lea.vmem [#allocation7], 384
        %v755 = vld [vmem:[%s754] sm:$0xf]
        %v756 = vld [vmem:[%s754 + $0x4] sm:$0xf]
        %v757 = vld [vmem:[%s754 + $0x8] sm:$0xf]
        %v758 = vld [vmem:[%s754 + $0xc] sm:$0xf]
        %v759 = vld [vmem:[%s754 + $0x10] sm:$0xf]
        %v760 = vld [vmem:[%s754 + $0x14] sm:$0xf]
        %v761 = vld [vmem:[%s754 + $0x18] sm:$0xf]
        %v762 = vld [vmem:[%s754 + $0x1c] sm:$0xf]
        %v763 = vld [vmem:[%s754 + $0x20] sm:$0xf]
        %v764 = vld [vmem:[%s754 + $0x24] sm:$0xf]
        %v765 = vld [vmem:[%s754 + $0x28] sm:$0xf]
        %v766 = vld [vmem:[%s754 + $0x2c] sm:$0xf]
        %v767 = vld [vmem:[%s754 + $0x30] sm:$0xf]
        %v768 = vld [vmem:[%s754 + $0x34] sm:$0xf]
        %v769 = vld [vmem:[%s754 + $0x38] sm:$0xf]
        %v770 = vld [vmem:[%s754 + $0x3c] sm:$0xf]
        %v771 = vld [vmem:[#allocation2 + $0x1] sm:$0xff]
        %v772 = vld [vmem:[#allocation2 + $0x9] sm:$0xff]
        %v773 = vpack.c.bf16 %v772, %v771
        %s774 = scalar_lea.vmem [#allocation7], 448
        %v775 = vld [vmem:[%s774] sm:$0xf]
        %v776 = vld [vmem:[%s774 + $0x4] sm:$0xf]
        %v777 = vld [vmem:[%s774 + $0x8] sm:$0xf]
        %v778 = vld [vmem:[%s774 + $0xc] sm:$0xf]
        %v779 = vld [vmem:[%s774 + $0x10] sm:$0xf]
        %v780 = vld [vmem:[%s774 + $0x14] sm:$0xf]
        %v781 = vld [vmem:[%s774 + $0x18] sm:$0xf]
        %v782 = vld [vmem:[%s774 + $0x1c] sm:$0xf]
        %v783 = vld [vmem:[%s774 + $0x20] sm:$0xf]
        %v784 = vld [vmem:[%s774 + $0x24] sm:$0xf]
        %v785 = vld [vmem:[%s774 + $0x28] sm:$0xf]
        %v786 = vld [vmem:[%s774 + $0x2c] sm:$0xf]
        %v787 = vld [vmem:[%s774 + $0x30] sm:$0xf]
        %v788 = vld [vmem:[%s774 + $0x34] sm:$0xf]
        %v789 = vld [vmem:[%s774 + $0x38] sm:$0xf]
        %v790 = vld [vmem:[%s774 + $0x3c] sm:$0xf]
        %v807 = vunpack.c.l.b16 %v775
        %v808 = vunpack.c.l.b16 %v776
        %v809 = vunpack.c.l.b16 %v777
        %v810 = vunpack.c.l.b16 %v778
        %v811 = vunpack.c.l.b16 %v779
        %v812 = vunpack.c.l.b16 %v780
        %v813 = vunpack.c.l.b16 %v781
        %v814 = vunpack.c.l.b16 %v782
        %v815 = vunpack.c.l.b16 %v783
        %v816 = vunpack.c.l.b16 %v784
        %v817 = vunpack.c.l.b16 %v785
        %v818 = vunpack.c.l.b16 %v786
        %v819 = vunpack.c.l.b16 %v787
        %v820 = vunpack.c.l.b16 %v788
        %v821 = vunpack.c.l.b16 %v789
        %v822 = vunpack.c.l.b16 %v790
        %v823 = vpack.c.b16 %v808, %v807
        %v824 = vpack.c.b16 %v810, %v809
        %v825 = vpack.c.b16 %v812, %v811
        %v826 = vpack.c.b16 %v814, %v813
        %v827 = vpack.c.b16 %v816, %v815
        %v828 = vpack.c.b16 %v818, %v817
        %v829 = vpack.c.b16 %v820, %v819
        %v830 = vpack.c.b16 %v822, %v821
        %839 = vmatpush.bf16.msra.mxu0 %v830
        %840 = vmatpush.bf16.msra.mxu0 %v829
        %841 = vmatpush.bf16.msra.mxu0 %v828
        %842 = vmatpush.bf16.msra.mxu0 %v827
        %843 = vmatpush.bf16.msra.mxu0 %v826
        %844 = vmatpush.bf16.msra.mxu0 %v825
        %845 = vmatpush.bf16.msra.mxu0 %v824
        %846 = vmatpush.bf16.msra.mxu0 %v823
        %847 = vmatmul.bf16.gmra.mxu0 %v773
        %v848 = vpop.f32.mrf.mxu0
        %v849 = vadd.f32 0.0, %v848
        %v850 = vpop.f32.mrf.mxu0
        %v851 = vadd.f32 0.0, %v850
        %852 = vdwg.mxu0
        %v869 = vunpack.c.l.b16 %v755
        %v870 = vunpack.c.l.b16 %v756
        %v871 = vunpack.c.l.b16 %v757
        %v872 = vunpack.c.l.b16 %v758
        %v873 = vunpack.c.l.b16 %v759
        %v874 = vunpack.c.l.b16 %v760
        %v875 = vunpack.c.l.b16 %v761
        %v876 = vunpack.c.l.b16 %v762
        %v877 = vunpack.c.l.b16 %v763
        %v878 = vunpack.c.l.b16 %v764
        %v879 = vunpack.c.l.b16 %v765
        %v880 = vunpack.c.l.b16 %v766
        %v881 = vunpack.c.l.b16 %v767
        %v882 = vunpack.c.l.b16 %v768
        %v883 = vunpack.c.l.b16 %v769
        %v884 = vunpack.c.l.b16 %v770
        %v885 = vpack.c.b16 %v870, %v869
        %v886 = vpack.c.b16 %v872, %v871
        %v887 = vpack.c.b16 %v874, %v873
        %v888 = vpack.c.b16 %v876, %v875
        %v889 = vpack.c.b16 %v878, %v877
        %v890 = vpack.c.b16 %v880, %v879
        %v891 = vpack.c.b16 %v882, %v881
        %v892 = vpack.c.b16 %v884, %v883
        %901 = vmatpush.bf16.msra.mxu0 %v892
        %902 = vmatpush.bf16.msra.mxu0 %v891
        %903 = vmatpush.bf16.msra.mxu0 %v890
        %904 = vmatpush.bf16.msra.mxu0 %v889
        %905 = vmatpush.bf16.msra.mxu0 %v888
        %906 = vmatpush.bf16.msra.mxu0 %v887
        %907 = vmatpush.bf16.msra.mxu0 %v886
        %908 = vmatpush.bf16.msra.mxu0 %v885
        %909 = vmatmul.bf16.gmra.mxu0 %v753
        %v910 = vpop.f32.mrf.mxu0
        %v911 = vadd.f32 %v849, %v910
        %v912 = vpop.f32.mrf.mxu0
        %v913 = vadd.f32 %v851, %v912
        %914 = vdwg.mxu0
        %v915 = vld [vmem:[#allocation2 + $0x2] sm:$0xff]
        %v916 = vld [vmem:[#allocation2 + $0xa] sm:$0xff]
        %v917 = vpack.c.bf16 %v916, %v915
        %s918 = scalar_lea.vmem [#allocation7], 512
        %v919 = vld [vmem:[%s918] sm:$0xf]
        %v920 = vld [vmem:[%s918 + $0x4] sm:$0xf]
        %v921 = vld [vmem:[%s918 + $0x8] sm:$0xf]
        %v922 = vld [vmem:[%s918 + $0xc] sm:$0xf]
        %v923 = vld [vmem:[%s918 + $0x10] sm:$0xf]
        %v924 = vld [vmem:[%s918 + $0x14] sm:$0xf]
        %v925 = vld [vmem:[%s918 + $0x18] sm:$0xf]
        %v926 = vld [vmem:[%s918 + $0x1c] sm:$0xf]
        %v927 = vld [vmem:[%s918 + $0x20] sm:$0xf]
        %v928 = vld [vmem:[%s918 + $0x24] sm:$0xf]
        %v929 = vld [vmem:[%s918 + $0x28] sm:$0xf]
        %v930 = vld [vmem:[%s918 + $0x2c] sm:$0xf]
        %v931 = vld [vmem:[%s918 + $0x30] sm:$0xf]
        %v932 = vld [vmem:[%s918 + $0x34] sm:$0xf]
        %v933 = vld [vmem:[%s918 + $0x38] sm:$0xf]
        %v934 = vld [vmem:[%s918 + $0x3c] sm:$0xf]
        %v951 = vunpack.c.l.b16 %v919
        %v952 = vunpack.c.l.b16 %v920
        %v953 = vunpack.c.l.b16 %v921
        %v954 = vunpack.c.l.b16 %v922
        %v955 = vunpack.c.l.b16 %v923
        %v956 = vunpack.c.l.b16 %v924
        %v957 = vunpack.c.l.b16 %v925
        %v958 = vunpack.c.l.b16 %v926
        %v959 = vunpack.c.l.b16 %v927
        %v960 = vunpack.c.l.b16 %v928
        %v961 = vunpack.c.l.b16 %v929
        %v962 = vunpack.c.l.b16 %v930
        %v963 = vunpack.c.l.b16 %v931
        %v964 = vunpack.c.l.b16 %v932
        %v965 = vunpack.c.l.b16 %v933
        %v966 = vunpack.c.l.b16 %v934
        %v967 = vpack.c.b16 %v952, %v951
        %v968 = vpack.c.b16 %v954, %v953
        %v969 = vpack.c.b16 %v956, %v955
        %v970 = vpack.c.b16 %v958, %v957
        %v971 = vpack.c.b16 %v960, %v959
        %v972 = vpack.c.b16 %v962, %v961
        %v973 = vpack.c.b16 %v964, %v963
        %v974 = vpack.c.b16 %v966, %v965
        %983 = vmatpush.bf16.msra.mxu0 %v974
        %984 = vmatpush.bf16.msra.mxu0 %v973
        %985 = vmatpush.bf16.msra.mxu0 %v972
        %986 = vmatpush.bf16.msra.mxu0 %v971
        %987 = vmatpush.bf16.msra.mxu0 %v970
        %988 = vmatpush.bf16.msra.mxu0 %v969
        %989 = vmatpush.bf16.msra.mxu0 %v968
        %990 = vmatpush.bf16.msra.mxu0 %v967
        %991 = vmatmul.bf16.gmra.mxu0 %v917
        %v992 = vpop.f32.mrf.mxu0
        %v993 = vadd.f32 0.0, %v992
        %v994 = vpop.f32.mrf.mxu0
        %v995 = vadd.f32 0.0, %v994
        %996 = vdwg.mxu0
        %v997 = vadd.f32 %v911, %v993
        %v998 = vadd.f32 %v913, %v995
        %s999 = scalar_lea.vmem [#allocation9], 2
        %v1000 = vld [vmem:[%s999] sm:$0x1]
        %v1002 = vperm.slane %v1000, 0
        %v1004 = vadd.f32 %v997, %v1002
        %v1005 = vadd.f32 %v998, %v1002
        %1006 = vst [vmem:[%s223] sm:$0xff] %v1004
        %1007 = vst [vmem:[%s223 + $0x8] sm:$0xff] %v1005
        %s1008 = sand.u32 %s97, 1
        %s1009 = scalar_lea.sflag [#allocation6], %s1008
        %s1010 = sand.u32 %s97, 1
        %s1011 = smul.addr %s1010, 16
        %s1012 = scalar_lea.vmem [#allocation10], %s1011
        // Predicated region
        $region45: #{tpu_custom_call.1} parent=31 // pred_check
          %p1013 = pneg %p107
        $region46: #{tpu_custom_call.1} parent=31 // pred_check_branch
          %1015 = sbr.rel (%p1013) target = $region48
        $region47: #{tpu_custom_call.1} parent=31 // pred_region
          %1017 = vsyncadd %s1009, 0
          %s1018 = smul.addr %s21, 2
          %s1019 = smul.addr %s1018, 8
          %s1020 = scalar_lea.hbm %s3, %s1019
          %s1021 = sshll.u32 %s1012, 4
          %s1022 = int_to_ptr.vmem [resolvable:$true] %s1021
          %s1023 = sshll.u32 %s1020, 4
          %s1024 = int_to_ptr.hbm [resolvable:$true] %s1023
          %1029 = dma.vmem_to_hbm [thread:$0]  %s1022, 256, %s1024, %s1009, 128, 128, 8
        $region48: #{tpu_custom_call.1} parent=31 // pred_fallthru
          _
      $region32: #{tpu_custom_call.1} parent=5 // pred_fallthru
        _
      %p1030 = scmp.le.s32.totalorder 2, %s16
      // Predicated region
      $region49: #{tpu_custom_call.1} parent=5 // pred_check
        %p1031 = pneg %p1030
      $region50: #{tpu_custom_call.1} parent=5 // pred_check_branch
        %1033 = sbr.rel (%p1031) target = $region52
      $region51: #{tpu_custom_call.1} parent=5 // pred_region
        %s1034 = ssub.s32 %s16, 2
        // Predicated region
        $region53: #{tpu_custom_call.1} parent=51 // pred_check
          %p1035 = pneg %p113
        $region54: #{tpu_custom_call.1} parent=51 // pred_check_branch
          %1037 = sbr.rel (%p1035) target = $region56
        $region55: #{tpu_custom_call.1} parent=51 // pred_region
          %s1038 = sand.u32 %s98, 1
          %s1039 = scalar_lea.sflag [#allocation6], %s1038
          %s1040 = sand.u32 %s98, 1
          %s1041 = smul.addr %s1040, 16
          %s1042 = scalar_lea.vmem [#allocation10], %s1041
          %1044 = dma.done %s1039, 256
        $region56: #{tpu_custom_call.1} parent=51 // pred_fallthru
          _
      $region52: #{tpu_custom_call.1} parent=5 // pred_fallthru
        _
    $region6: #{tpu_custom_call.1} parent=1 // loop_footer
      %s20 = sadd.s32 1, %s16
    $region7: #{tpu_custom_call.1} parent=1 // loop_footer_branch
      %15 = sbr.rel target = $region3
    $region8: #{tpu_custom_call.1} parent=1 // loop_exit
      _
    %1045 = vsyncpa [#allocation5], 1
    %s1046 = scalar_lea.sflag [#allocation5], 1
    %1047 = vsyncpa %s1046, 1
    %1048 = vsyncpa [#allocation8], 1
    %1049 = vsyncpa [#allocation6], 1
    %s1050 = scalar_lea.sflag [#allocation6], 1
    %1051 = vsyncpa %s1050, 1

</llo_original>
